<compile_context>
chip_gen: v7x
topology: tpu7x:2x2x1
jax: 0.10.0
libtpu: 0.0.40
codegen_flags: <defaults>
</compile_context>

<pallas_src>
import functools

import jax
import jax.numpy as jnp
from jax.experimental import pallas as pl
from jax.experimental.pallas import tpu as pltpu


def attention_kernel(x_ref, gamma_ref, beta_ref, wqkv_ref, wout_ref, bo_ref,
                     o_ref, qkv_ref, ao_ref, *, heads, dim_head, eps,
                     approx_recip):
    """One grid step = one batch element.  All refs live in VMEM."""
    cdt = qkv_ref.dtype                       # matmul-operand (compute) dtype
    inner = heads * dim_head

    # --- LayerNorm (f32 stats), once per batch element -----------------------
    x = x_ref[...].astype(jnp.float32)                          # (N, dim)
    mean = jnp.mean(x, axis=-1, keepdims=True)
    var = jnp.mean(jnp.square(x - mean), axis=-1, keepdims=True)
    xn = (x - mean) * jax.lax.rsqrt(var + eps)
    xn = (xn * gamma_ref[...] + beta_ref[...]).astype(cdt)      # (N, dim), cdt

    # --- Fused QKV projection: ONE lane-dense (N,dim)@(dim,3*inner) matmul ----
    # (softmax scale is pre-folded into the W_q columns at param-prep time)
    qkv_ref[...] = jnp.dot(xn, wqkv_ref[...],
                           preferred_element_type=jnp.float32).astype(cdt)

    # --- Per-head attention; static column slices of the QKV scratch ----------
    # heads is small; each head's (N,N) scores die inside its iteration.
    for h in range(heads):
        lo = h * dim_head
        q = qkv_ref[:, lo:lo + dim_head]                        # (N, dh) cdt
        k = qkv_ref[:, inner + lo:inner + lo + dim_head]        # (N, dh) cdt
        v = qkv_ref[:, 2 * inner + lo:2 * inner + lo + dim_head]

        # contract last dims directly (no materialized k.T); f32 accumulate
        dots = jax.lax.dot_general(q, k, (((1,), (1,)), ((), ())),
                                   preferred_element_type=jnp.float32)  # (N, N)

        # numerically stable softmax; normalization deferred past attn@v
        m = jnp.max(dots, axis=-1, keepdims=True)
        e = jnp.exp(dots - m)                                   # (N, N) f32
        s = jnp.sum(e, axis=-1, keepdims=True)                  # (N, 1) f32

        out_h = jnp.dot(e.astype(cdt), v,
                        preferred_element_type=jnp.float32)     # (N, dh) f32
        out_h = out_h * pl.reciprocal(s, approx=approx_recip)   # small row-normalize

        ao_ref[:, lo:lo + dim_head] = out_h.astype(cdt)         # head-major concat

    # --- Deferred output projection: ONE (N,inner)@(inner,dim) matmul + bias --
    o_ref[...] = (jnp.dot(ao_ref[...], wout_ref[...],
                          preferred_element_type=jnp.float32)
                  + bo_ref[...]).astype(o_ref.dtype)


def prepare_attention_params(params, *, heads, dim_head,
                             compute_dtype=jnp.bfloat16):
    """One-time weight relayout / cast / scale-folding (hoisted out of forward)."""
    inner = heads * dim_head
    dim = params["w_qkv"].shape[0]
    scale = dim_head ** -0.5

    w_qkv = jnp.asarray(params["w_qkv"], jnp.float32)           # (dim, 3*inner)
    w_qkv = w_qkv.at[:, :inner].multiply(scale)                 # fold scale into W_q
    return {
        "w_qkv": w_qkv.astype(compute_dtype),                               # (dim, 3*inner)
        "w_out": jnp.asarray(params["w_out"], compute_dtype),               # (inner, dim)
        "gamma": jnp.asarray(params["gamma"], jnp.float32).reshape(1, dim),
        "beta": jnp.asarray(params["beta"], jnp.float32).reshape(1, dim),
        "b_out": jnp.asarray(params["b_out"], jnp.float32).reshape(1, dim),
    }


def _vmem_limit_bytes():
    # ~3/4 of physical VMEM: ~96 MiB on v5e/v6e (128 MiB), ~48 MiB on v7x (64 MiB).
    try:
        cap = pltpu.get_tpu_info().vmem_capacity_bytes
        return min(int(cap) * 3 // 4, 100 * 1024 * 1024)
    except Exception:
        return 48 * 1024 * 1024


def attention_forward(x, prepared, *, heads, dim_head):
    B, N, dim = x.shape
    inner = heads * dim_head
    cdt = prepared["w_qkv"].dtype
    approx_recip = bool(cdt != jnp.float32)    # exact divide on the f32 debug path

    kernel = functools.partial(attention_kernel, heads=heads, dim_head=dim_head,
                               eps=1e-5, approx_recip=approx_recip)

    return pl.pallas_call(
        kernel,
        out_shape=jax.ShapeDtypeStruct((B, N, dim), x.dtype),
        grid_spec=pltpu.PrefetchScalarGridSpec(
            num_scalar_prefetch=0,
            grid=(B,),                                   # batch only; parallel for megacore
            in_specs=[
                pl.BlockSpec((None, N, dim), lambda b: (b, 0, 0)),      # x[b]
                pl.BlockSpec((1, dim), lambda b: (0, 0)),               # LN gamma
                pl.BlockSpec((1, dim), lambda b: (0, 0)),               # LN beta
                pl.BlockSpec((dim, 3 * inner), lambda b: (0, 0)),       # W_qkv (one DMA)
                pl.BlockSpec((inner, dim), lambda b: (0, 0)),           # W_out (one DMA)
                pl.BlockSpec((1, dim), lambda b: (0, 0)),               # b_out
            ],
            out_specs=pl.BlockSpec((None, N, dim), lambda b: (b, 0, 0)),
            scratch_shapes=[
                pltpu.VMEM((N, 3 * inner), cdt),    # fused QKV result, reused by all heads
                pltpu.VMEM((N, inner), cdt),        # head-concat attention output
            ]),
        compiler_params=pltpu.CompilerParams(
            dimension_semantics=("parallel",),
            vmem_limit_bytes=_vmem_limit_bytes()),
    )(x, prepared["gamma"], prepared["beta"], prepared["w_qkv"],
      prepared["w_out"], prepared["b_out"])


def reference_forward(x, params, *, heads, dim_head):
    """Pure-JAX reference mirroring the PyTorch forward (dropout = identity)."""
    scale = dim_head ** -0.5
    mean = jnp.mean(x, axis=-1, keepdims=True)
    var = jnp.mean((x - mean) ** 2, axis=-1, keepdims=True)
    xn = (x - mean) / jnp.sqrt(var + 1e-5) * params["gamma"] + params["beta"]
    qkv = xn @ params["w_qkv"]                                  # (B, N, 3*inner)
    q, k, v = jnp.split(qkv, 3, axis=-1)

    def split_heads(t):                                         # 'b n (h d) -> b h n d'
        B, N, _ = t.shape
        return t.reshape(B, N, heads, dim_head).transpose(0, 2, 1, 3)

    q, k, v = map(split_heads, (q, k, v))
    dots = jnp.einsum("bhnd,bhmd->bhnm", q, k) * scale
    attn = jax.nn.softmax(dots, axis=-1)
    out = jnp.einsum("bhnm,bhmd->bhnd", attn, v)
    B, H, N, D = out.shape
    out = out.transpose(0, 2, 1, 3).reshape(B, N, H * D)        # 'b h n d -> b n (h d)'
    return out @ params["w_out"] + params["b_out"]


if __name__ == "__main__":
    B, N, dim = 2, 8, 32
    heads, dim_head = 4, 16
    inner = heads * dim_head

    key = jax.random.PRNGKey(0)
    kx, kqkv, kout, kb, kg, kbt = jax.random.split(key, 6)

    x = jax.random.normal(kx, (B, N, dim), dtype=jnp.float32)
    params = {
        "gamma": 1.0 + 0.1 * jax.random.normal(kg, (dim,), jnp.float32),
        "beta": 0.1 * jax.random.normal(kbt, (dim,), jnp.float32),
        # weights stored pre-transposed: y = x @ W  (equivalent to torch x @ W.T)
        "w_qkv": jax.random.normal(kqkv, (dim, 3 * inner), jnp.float32) * 0.05,
        "w_out": jax.random.normal(kout, (inner, dim), jnp.float32) * 0.05,
        "b_out": jax.random.normal(kb, (1, dim), jnp.float32) * 0.05,
    }

    y_ref = reference_forward(x, params, heads=heads, dim_head=dim_head)

    # f32 compute path: exact comparison against the pure-JAX reference.
    prep_f32 = prepare_attention_params(params, heads=heads, dim_head=dim_head,
                                        compute_dtype=jnp.float32)
    y = attention_forward(x, prep_f32, heads=heads, dim_head=dim_head)
    y = jax.block_until_ready(y)
    assert y.shape == (B, N, dim)
    assert jnp.allclose(y, y_ref, atol=1e-4, rtol=1e-4), "f32 mismatch vs JAX reference"

    # bf16 production path (default): bf16 MXU operands, f32 accumulation,
    # approx reciprocal for the deferred softmax normalization.
    prep_bf16 = prepare_attention_params(params, heads=heads, dim_head=dim_head)
    y_bf16 = attention_forward(x, prep_bf16, heads=heads, dim_head=dim_head)
    y_bf16 = jax.block_until_ready(y_bf16)
    assert jnp.allclose(y_bf16.astype(jnp.float32), y_ref,
                        atol=5e-2, rtol=5e-2), "bf16 mismatch vs JAX reference"

    print("KERNEL_OK")
</pallas_src>

<mosaic_0001>
module attributes {stable_mosaic.version = 11 : i64} {
  func.func @attention_kernel(%arg0: i32, %arg1: memref<1x8x32xf32, #tpu.memory_space<vmem>>, %arg2: memref<1x32xf32, #tpu.memory_space<vmem>>, %arg3: memref<1x32xf32, #tpu.memory_space<vmem>>, %arg4: memref<32x192xf32, #tpu.memory_space<vmem>>, %arg5: memref<64x32xf32, #tpu.memory_space<vmem>>, %arg6: memref<1x32xf32, #tpu.memory_space<vmem>>, %arg7: memref<1x8x32xf32, #tpu.memory_space<vmem>>, %arg8: memref<8x192xf32, #tpu.memory_space<vmem>>, %arg9: memref<8x64xf32, #tpu.memory_space<vmem>>) attributes {dimension_semantics = [#tpu.dimension_semantics<parallel>], iteration_bounds = array<i64: 2>, scalar_prefetch = 0 : i64, scratch_operands = 2 : i64, tpu.core_type = #tpu.core_type<tc>, window_params = [{transform_indices = @transform_0, window_bounds = array<i64: 1, 8, 32>}, {pipeline_mode = #tpu.pipeline_mode<synchronous>, transform_indices = @transform_1, window_bounds = array<i64: 1, 32>}, {pipeline_mode = #tpu.pipeline_mode<synchronous>, transform_indices = @transform_2, window_bounds = array<i64: 1, 32>}, {pipeline_mode = #tpu.pipeline_mode<synchronous>, transform_indices = @transform_3, window_bounds = array<i64: 32, 192>}, {pipeline_mode = #tpu.pipeline_mode<synchronous>, transform_indices = @transform_4, window_bounds = array<i64: 64, 32>}, {pipeline_mode = #tpu.pipeline_mode<synchronous>, transform_indices = @transform_5, window_bounds = array<i64: 1, 32>}, {transform_indices = @transform_6, window_bounds = array<i64: 1, 8, 32>}]} {
    %c0 = arith.constant 0 : index
    %c0_0 = arith.constant 0 : index
    %c0_1 = arith.constant 0 : index
    %0 = vector.load %arg1[%c0, %c0_0, %c0_1] : memref<1x8x32xf32, #tpu.memory_space<vmem>>, vector<1x8x32xf32>
    %1 = vector.shape_cast %0 : vector<1x8x32xf32> to vector<8x32xf32>
    %cst = arith.constant dense<0.000000e+00> : vector<8xf32>
    %2 = vector.multi_reduction <add>, %1, %cst [1] : vector<8x32xf32> to vector<8xf32>
    %3 = vector.shape_cast %2 : vector<8xf32> to vector<8x1xf32>
    %cst_2 = arith.constant 3.200000e+01 : f32
    %4 = vector.broadcast %cst_2 : f32 to vector<8x1xf32>
    %5 = arith.divf %3, %4 : vector<8x1xf32>
    %6 = vector.broadcast %5 : vector<8x1xf32> to vector<8x32xf32>
    %7 = arith.subf %1, %6 : vector<8x32xf32>
    %8 = arith.mulf %7, %7 : vector<8x32xf32>
    %cst_3 = arith.constant dense<0.000000e+00> : vector<8xf32>
    %9 = vector.multi_reduction <add>, %8, %cst_3 [1] : vector<8x32xf32> to vector<8xf32>
    %10 = vector.shape_cast %9 : vector<8xf32> to vector<8x1xf32>
    %cst_4 = arith.constant 3.200000e+01 : f32
    %11 = vector.broadcast %cst_4 : f32 to vector<8x1xf32>
    %12 = arith.divf %10, %11 : vector<8x1xf32>
    %13 = vector.broadcast %5 : vector<8x1xf32> to vector<8x32xf32>
    %14 = arith.subf %1, %13 : vector<8x32xf32>
    %cst_5 = arith.constant 9.99999974E-6 : f32
    %15 = vector.broadcast %cst_5 : f32 to vector<8x1xf32>
    %16 = arith.addf %12, %15 : vector<8x1xf32>
    %17 = math.rsqrt %16 : vector<8x1xf32>
    %18 = vector.broadcast %17 : vector<8x1xf32> to vector<8x32xf32>
    %19 = arith.mulf %14, %18 : vector<8x32xf32>
    %c0_6 = arith.constant 0 : index
    %c0_7 = arith.constant 0 : index
    %20 = vector.load %arg2[%c0_6, %c0_7] : memref<1x32xf32, #tpu.memory_space<vmem>>, vector<1x32xf32>
    %21 = vector.broadcast %20 : vector<1x32xf32> to vector<8x32xf32>
    %22 = arith.mulf %19, %21 : vector<8x32xf32>
    %c0_8 = arith.constant 0 : index
    %c0_9 = arith.constant 0 : index
    %23 = vector.load %arg3[%c0_8, %c0_9] : memref<1x32xf32, #tpu.memory_space<vmem>>, vector<1x32xf32>
    %24 = vector.broadcast %23 : vector<1x32xf32> to vector<8x32xf32>
    %25 = arith.addf %22, %24 : vector<8x32xf32>
    %c0_10 = arith.constant 0 : index
    %c0_11 = arith.constant 0 : index
    %26 = vector.load %arg4[%c0_10, %c0_11] : memref<32x192xf32, #tpu.memory_space<vmem>>, vector<32x192xf32>
    %cst_12 = arith.constant dense<0.000000e+00> : vector<8x192xf32>
    %27 = tpu.matmul %25, %26, %cst_12 {dimension_numbers = #tpu.dot_dimension_numbers<[1], [0], [0], [1], [0, 0, 1, 1], [], []>} : vector<8x32xf32>, vector<32x192xf32>, vector<8x192xf32> -> vector<8x192xf32>
    %c0_13 = arith.constant 0 : index
    %c0_14 = arith.constant 0 : index
    %28 = vector.load %arg8[%c0_13, %c0_14] : memref<8x192xf32, #tpu.memory_space<vmem>>, vector<8x192xf32>
    tpu.vector_store %arg8[%c0_13, %c0_14], %27 {strides = array<i32>} : memref<8x192xf32, #tpu.memory_space<vmem>>, vector<8x192xf32>,
    %c0_15 = arith.constant 0 : index
    %c0_16 = arith.constant 0 : index
    %29 = vector.load %arg8[%c0_15, %c0_16] : memref<8x192xf32, #tpu.memory_space<vmem>>, vector<8x16xf32>
    %c0_17 = arith.constant 0 : index
    %c64 = arith.constant 64 : index
    %30 = vector.load %arg8[%c0_17, %c64] : memref<8x192xf32, #tpu.memory_space<vmem>>, vector<8x16xf32>
    %c0_18 = arith.constant 0 : index
    %c128 = arith.constant 128 : index
    %31 = vector.load %arg8[%c0_18, %c128] : memref<8x192xf32, #tpu.memory_space<vmem>>, vector<8x16xf32>
    %cst_19 = arith.constant dense<0.000000e+00> : vector<8x8xf32>
    %32 = tpu.matmul %29, %30, %cst_19 {dimension_numbers = #tpu.dot_dimension_numbers<[1], [1], [0], [0], [0, 0, 1, 0], [], []>} : vector<8x16xf32>, vector<8x16xf32>, vector<8x8xf32> -> vector<8x8xf32>
    %cst_20 = arith.constant dense<0xFF800000> : vector<8xf32>
    %33 = vector.multi_reduction <maximumf>, %32, %cst_20 [1] : vector<8x8xf32> to vector<8xf32>
    %34 = vector.shape_cast %33 : vector<8xf32> to vector<8x1xf32>
    %35 = vector.broadcast %34 : vector<8x1xf32> to vector<8x8xf32>
    %36 = arith.subf %32, %35 : vector<8x8xf32>
    %37 = math.exp %36 : vector<8x8xf32>
    %cst_21 = arith.constant dense<0.000000e+00> : vector<8xf32>
    %38 = vector.multi_reduction <add>, %37, %cst_21 [1] : vector<8x8xf32> to vector<8xf32>
    %39 = vector.shape_cast %38 : vector<8xf32> to vector<8x1xf32>
    %cst_22 = arith.constant dense<0.000000e+00> : vector<8x16xf32>
    %40 = tpu.matmul %37, %31, %cst_22 {dimension_numbers = #tpu.dot_dimension_numbers<[1], [0], [0], [1], [0, 0, 1, 1], [], []>} : vector<8x8xf32>, vector<8x16xf32>, vector<8x16xf32> -> vector<8x16xf32>
    %41 = tpu.reciprocal %39 : vector<8x1xf32> -> vector<8x1xf32>
    %42 = vector.broadcast %41 : vector<8x1xf32> to vector<8x16xf32>
    %43 = arith.mulf %40, %42 : vector<8x16xf32>
    %c0_23 = arith.constant 0 : index
    %c0_24 = arith.constant 0 : index
    %44 = vector.load %arg9[%c0_23, %c0_24] : memref<8x64xf32, #tpu.memory_space<vmem>>, vector<8x16xf32>
    tpu.vector_store %arg9[%c0_23, %c0_24], %43 {strides = array<i32>} : memref<8x64xf32, #tpu.memory_space<vmem>>, vector<8x16xf32>,
    %c0_25 = arith.constant 0 : index
    %c16 = arith.constant 16 : index
    %45 = vector.load %arg8[%c0_25, %c16] : memref<8x192xf32, #tpu.memory_space<vmem>>, vector<8x16xf32>
    %c0_26 = arith.constant 0 : index
    %c80 = arith.constant 80 : index
    %46 = vector.load %arg8[%c0_26, %c80] : memref<8x192xf32, #tpu.memory_space<vmem>>, vector<8x16xf32>
    %c0_27 = arith.constant 0 : index
    %c144 = arith.constant 144 : index
    %47 = vector.load %arg8[%c0_27, %c144] : memref<8x192xf32, #tpu.memory_space<vmem>>, vector<8x16xf32>
    %cst_28 = arith.constant dense<0.000000e+00> : vector<8x8xf32>
    %48 = tpu.matmul %45, %46, %cst_28 {dimension_numbers = #tpu.dot_dimension_numbers<[1], [1], [0], [0], [0, 0, 1, 0], [], []>} : vector<8x16xf32>, vector<8x16xf32>, vector<8x8xf32> -> vector<8x8xf32>
    %cst_29 = arith.constant dense<0xFF800000> : vector<8xf32>
    %49 = vector.multi_reduction <maximumf>, %48, %cst_29 [1] : vector<8x8xf32> to vector<8xf32>
    %50 = vector.shape_cast %49 : vector<8xf32> to vector<8x1xf32>
    %51 = vector.broadcast %50 : vector<8x1xf32> to vector<8x8xf32>
    %52 = arith.subf %48, %51 : vector<8x8xf32>
    %53 = math.exp %52 : vector<8x8xf32>
    %cst_30 = arith.constant dense<0.000000e+00> : vector<8xf32>
    %54 = vector.multi_reduction <add>, %53, %cst_30 [1] : vector<8x8xf32> to vector<8xf32>
    %55 = vector.shape_cast %54 : vector<8xf32> to vector<8x1xf32>
    %cst_31 = arith.constant dense<0.000000e+00> : vector<8x16xf32>
    %56 = tpu.matmul %53, %47, %cst_31 {dimension_numbers = #tpu.dot_dimension_numbers<[1], [0], [0], [1], [0, 0, 1, 1], [], []>} : vector<8x8xf32>, vector<8x16xf32>, vector<8x16xf32> -> vector<8x16xf32>
    %57 = tpu.reciprocal %55 : vector<8x1xf32> -> vector<8x1xf32>
    %58 = vector.broadcast %57 : vector<8x1xf32> to vector<8x16xf32>
    %59 = arith.mulf %56, %58 : vector<8x16xf32>
    %c0_32 = arith.constant 0 : index
    %c16_33 = arith.constant 16 : index
    %60 = vector.load %arg9[%c0_32, %c16_33] : memref<8x64xf32, #tpu.memory_space<vmem>>, vector<8x16xf32>
    tpu.vector_store %arg9[%c0_32, %c16_33], %59 {strides = array<i32>} : memref<8x64xf32, #tpu.memory_space<vmem>>, vector<8x16xf32>,
    %c0_34 = arith.constant 0 : index
    %c32 = arith.constant 32 : index
    %61 = vector.load %arg8[%c0_34, %c32] : memref<8x192xf32, #tpu.memory_space<vmem>>, vector<8x16xf32>
    %c0_35 = arith.constant 0 : index
    %c96 = arith.constant 96 : index
    %62 = vector.load %arg8[%c0_35, %c96] : memref<8x192xf32, #tpu.memory_space<vmem>>, vector<8x16xf32>
    %c0_36 = arith.constant 0 : index
    %c160 = arith.constant 160 : index
    %63 = vector.load %arg8[%c0_36, %c160] : memref<8x192xf32, #tpu.memory_space<vmem>>, vector<8x16xf32>
    %cst_37 = arith.constant dense<0.000000e+00> : vector<8x8xf32>
    %64 = tpu.matmul %61, %62, %cst_37 {dimension_numbers = #tpu.dot_dimension_numbers<[1], [1], [0], [0], [0, 0, 1, 0], [], []>} : vector<8x16xf32>, vector<8x16xf32>, vector<8x8xf32> -> vector<8x8xf32>
    %cst_38 = arith.constant dense<0xFF800000> : vector<8xf32>
    %65 = vector.multi_reduction <maximumf>, %64, %cst_38 [1] : vector<8x8xf32> to vector<8xf32>
    %66 = vector.shape_cast %65 : vector<8xf32> to vector<8x1xf32>
    %67 = vector.broadcast %66 : vector<8x1xf32> to vector<8x8xf32>
    %68 = arith.subf %64, %67 : vector<8x8xf32>
    %69 = math.exp %68 : vector<8x8xf32>
    %cst_39 = arith.constant dense<0.000000e+00> : vector<8xf32>
    %70 = vector.multi_reduction <add>, %69, %cst_39 [1] : vector<8x8xf32> to vector<8xf32>
    %71 = vector.shape_cast %70 : vector<8xf32> to vector<8x1xf32>
    %cst_40 = arith.constant dense<0.000000e+00> : vector<8x16xf32>
    %72 = tpu.matmul %69, %63, %cst_40 {dimension_numbers = #tpu.dot_dimension_numbers<[1], [0], [0], [1], [0, 0, 1, 1], [], []>} : vector<8x8xf32>, vector<8x16xf32>, vector<8x16xf32> -> vector<8x16xf32>
    %73 = tpu.reciprocal %71 : vector<8x1xf32> -> vector<8x1xf32>
    %74 = vector.broadcast %73 : vector<8x1xf32> to vector<8x16xf32>
    %75 = arith.mulf %72, %74 : vector<8x16xf32>
    %c0_41 = arith.constant 0 : index
    %c32_42 = arith.constant 32 : index
    %76 = vector.load %arg9[%c0_41, %c32_42] : memref<8x64xf32, #tpu.memory_space<vmem>>, vector<8x16xf32>
    tpu.vector_store %arg9[%c0_41, %c32_42], %75 {strides = array<i32>} : memref<8x64xf32, #tpu.memory_space<vmem>>, vector<8x16xf32>,
    %c0_43 = arith.constant 0 : index
    %c48 = arith.constant 48 : index
    %77 = vector.load %arg8[%c0_43, %c48] : memref<8x192xf32, #tpu.memory_space<vmem>>, vector<8x16xf32>
    %c0_44 = arith.constant 0 : index
    %c112 = arith.constant 112 : index
    %78 = vector.load %arg8[%c0_44, %c112] : memref<8x192xf32, #tpu.memory_space<vmem>>, vector<8x16xf32>
    %c0_45 = arith.constant 0 : index
    %c176 = arith.constant 176 : index
    %79 = vector.load %arg8[%c0_45, %c176] : memref<8x192xf32, #tpu.memory_space<vmem>>, vector<8x16xf32>
    %cst_46 = arith.constant dense<0.000000e+00> : vector<8x8xf32>
    %80 = tpu.matmul %77, %78, %cst_46 {dimension_numbers = #tpu.dot_dimension_numbers<[1], [1], [0], [0], [0, 0, 1, 0], [], []>} : vector<8x16xf32>, vector<8x16xf32>, vector<8x8xf32> -> vector<8x8xf32>
    %cst_47 = arith.constant dense<0xFF800000> : vector<8xf32>
    %81 = vector.multi_reduction <maximumf>, %80, %cst_47 [1] : vector<8x8xf32> to vector<8xf32>
    %82 = vector.shape_cast %81 : vector<8xf32> to vector<8x1xf32>
    %83 = vector.broadcast %82 : vector<8x1xf32> to vector<8x8xf32>
    %84 = arith.subf %80, %83 : vector<8x8xf32>
    %85 = math.exp %84 : vector<8x8xf32>
    %cst_48 = arith.constant dense<0.000000e+00> : vector<8xf32>
    %86 = vector.multi_reduction <add>, %85, %cst_48 [1] : vector<8x8xf32> to vector<8xf32>
    %87 = vector.shape_cast %86 : vector<8xf32> to vector<8x1xf32>
    %cst_49 = arith.constant dense<0.000000e+00> : vector<8x16xf32>
    %88 = tpu.matmul %85, %79, %cst_49 {dimension_numbers = #tpu.dot_dimension_numbers<[1], [0], [0], [1], [0, 0, 1, 1], [], []>} : vector<8x8xf32>, vector<8x16xf32>, vector<8x16xf32> -> vector<8x16xf32>
    %89 = tpu.reciprocal %87 : vector<8x1xf32> -> vector<8x1xf32>
    %90 = vector.broadcast %89 : vector<8x1xf32> to vector<8x16xf32>
    %91 = arith.mulf %88, %90 : vector<8x16xf32>
    %c0_50 = arith.constant 0 : index
    %c48_51 = arith.constant 48 : index
    %92 = vector.load %arg9[%c0_50, %c48_51] : memref<8x64xf32, #tpu.memory_space<vmem>>, vector<8x16xf32>
    tpu.vector_store %arg9[%c0_50, %c48_51], %91 {strides = array<i32>} : memref<8x64xf32, #tpu.memory_space<vmem>>, vector<8x16xf32>,
    %c0_52 = arith.constant 0 : index
    %c0_53 = arith.constant 0 : index
    %93 = vector.load %arg9[%c0_52, %c0_53] : memref<8x64xf32, #tpu.memory_space<vmem>>, vector<8x64xf32>
    %c0_54 = arith.constant 0 : index
    %c0_55 = arith.constant 0 : index
    %94 = vector.load %arg5[%c0_54, %c0_55] : memref<64x32xf32, #tpu.memory_space<vmem>>, vector<64x32xf32>
    %cst_56 = arith.constant dense<0.000000e+00> : vector<8x32xf32>
    %95 = tpu.matmul %93, %94, %cst_56 {dimension_numbers = #tpu.dot_dimension_numbers<[1], [0], [0], [1], [0, 0, 1, 1], [], []>} : vector<8x64xf32>, vector<64x32xf32>, vector<8x32xf32> -> vector<8x32xf32>
    %c0_57 = arith.constant 0 : index
    %c0_58 = arith.constant 0 : index
    %96 = vector.load %arg6[%c0_57, %c0_58] : memref<1x32xf32, #tpu.memory_space<vmem>>, vector<1x32xf32>
    %97 = vector.broadcast %96 : vector<1x32xf32> to vector<8x32xf32>
    %98 = arith.addf %95, %97 : vector<8x32xf32>
    %c0_59 = arith.constant 0 : index
    %c0_60 = arith.constant 0 : index
    %c0_61 = arith.constant 0 : index
    %99 = vector.load %arg7[%c0_59, %c0_60, %c0_61] : memref<1x8x32xf32, #tpu.memory_space<vmem>>, vector<1x8x32xf32>
    %100 = vector.shape_cast %99 : vector<1x8x32xf32> to vector<8x32xf32>
    %101 = vector.shape_cast %98 : vector<8x32xf32> to vector<1x8x32xf32>
    tpu.vector_store %arg7[%c0_59, %c0_60, %c0_61], %101 {strides = array<i32>} : memref<1x8x32xf32, #tpu.memory_space<vmem>>, vector<1x8x32xf32>,
    return
  }
  func.func @transform_0(%arg0: i32) -> (i32, i32, i32) {
    %c0_i32 = arith.constant 0 : i32
    %c0_i32_0 = arith.constant 0 : i32
    %c0_i32_1 = arith.constant 0 : i32
    return %arg0, %c0_i32, %c0_i32_0 : i32, i32, i32
  }
  func.func @transform_1(%arg0: i32) -> (i32, i32) {
    %c0_i32 = arith.constant 0 : i32
    %c0_i32_0 = arith.constant 0 : i32
    %c0_i32_1 = arith.constant 0 : i32
    return %c0_i32, %c0_i32_0 : i32, i32
  }
  func.func @transform_2(%arg0: i32) -> (i32, i32) {
    %c0_i32 = arith.constant 0 : i32
    %c0_i32_0 = arith.constant 0 : i32
    %c0_i32_1 = arith.constant 0 : i32
    return %c0_i32, %c0_i32_0 : i32, i32
  }
  func.func @transform_3(%arg0: i32) -> (i32, i32) {
    %c0_i32 = arith.constant 0 : i32
    %c0_i32_0 = arith.constant 0 : i32
    %c0_i32_1 = arith.constant 0 : i32
    return %c0_i32, %c0_i32_0 : i32, i32
  }
  func.func @transform_4(%arg0: i32) -> (i32, i32) {
    %c0_i32 = arith.constant 0 : i32
    %c0_i32_0 = arith.constant 0 : i32
    %c0_i32_1 = arith.constant 0 : i32
    return %c0_i32, %c0_i32_0 : i32, i32
  }
  func.func @transform_5(%arg0: i32) -> (i32, i32) {
    %c0_i32 = arith.constant 0 : i32
    %c0_i32_0 = arith.constant 0 : i32
    %c0_i32_1 = arith.constant 0 : i32
    return %c0_i32, %c0_i32_0 : i32, i32
  }
  func.func @transform_6(%arg0: i32) -> (i32, i32, i32) {
    %c0_i32 = arith.constant 0 : i32
    %c0_i32_0 = arith.constant 0 : i32
    %c0_i32_1 = arith.constant 0 : i32
    return %arg0, %c0_i32, %c0_i32_0 : i32, i32, i32
  }
}

</mosaic_0001>

<llo_original>
// kernel: tpu_custom_call.1
$region0: #{tpu_custom_call.1}
  #allocation0 [shape = 'u32[]', space=smem, size = 0x4, offset = 0x4, fixed_abs, tag = 'smem constant byte address 0x4 - core index']
  #allocation1 [shape = 'u32[144,128]{1,0:T(1,128)}', space=vmem, size = 0x12000, scoped, tag = 'internal scratch']
  #allocation2 [shape = 'f32[8,192]{1,0:T(8,128)}', space=vmem, size = 0x2000, scoped, tag = 'scratch operand']
  #allocation3 [shape = 'f32[8,64]{1,0:T(8,128)}', space=vmem, size = 0x1000, scoped, tag = 'scratch operand']
  %s0 = inlined_call_operand.vmem [shape: f32[2,8,32], index: 0, kind: input, shape index: {}]
  %s1 = inlined_call_operand.vmem [shape: f32[1,32], index: 1, kind: input, shape index: {}]
  %s2 = inlined_call_operand.vmem [shape: f32[1,32], index: 2, kind: input, shape index: {}]
  %s3 = inlined_call_operand.vmem [shape: f32[32,192], index: 3, kind: input, shape index: {}]
  %s4 = inlined_call_operand.vmem [shape: f32[64,32], index: 4, kind: input, shape index: {}]
  %s5 = inlined_call_operand.vmem [shape: f32[1,32], index: 5, kind: input, shape index: {}]
  %s6 = inlined_call_operand.hbm [shape: f32[2,8,32], index: 6, kind: output, shape index: {}]
  %s7 = sld [smem:[#allocation0]]
  $region57: #{tpu_custom_call.1} parent=0
    _
  %s9 = ssub.s32 1, %s7
  %s10 = scalar_select 0, %s9, %s7
  $region1: #{tpu_custom_call.1} parent=0
    #allocation4 [shape = 'u8[8192]{0}', space=vmem, size = 0x2000, scoped, tag = 'output window, operand 0']
    #allocation5 [shape = 's32[2]{0}', space=sflag, size = 0x8, scoped, tag = 'scoped memory for tpu_custom_call.1']
    %11 = vsyncpa [#allocation5], 0
    %s12 = scalar_lea.sflag [#allocation5], 1
    %13 = vsyncpa %s12, 0
    loop: start=0, step=1, limit=4
    $region2: #{tpu_custom_call.1} parent=1 // loop_pre_header
      _
    $region3: #{tpu_custom_call.1} parent=1 // loop_header
      %s15 = sphi 0, %s19
      %p16 = scmp.ge.s32.totalorder %s15, 4
      %s25 = sphi 0, %s27
      %s28 = sphi 0, %s25
      %s29 = sphi 0, %s28
      %s45 = sphi 0, %s29
      %s49 = sphi 0, %s49
      %s51 = sphi 0, %s49
      %s52 = sphi 0, %s51
      %s66 = sphi 0, %s52
      %s70 = sphi 0, %s70
      %s72 = sphi 0, %s70
      %s73 = sphi 0, %s72
      %s87 = sphi 0, %s73
      %s91 = sphi 0, %s91
      %s93 = sphi 0, %s91
      %s94 = sphi 0, %s93
      %s108 = sphi 0, %s94
      %s112 = sphi 0, %s112
      %s114 = sphi 0, %s112
      %s115 = sphi 0, %s114
      %s129 = sphi 0, %s115
      %s133 = sphi 0, %s133
      %s135 = sphi 0, %s133
      %s136 = sphi 0, %s135
      %s150 = sphi 0, %s136
      %s156 = sphi 0, %s158
      %s159 = sphi 0, %s156
      %s160 = sphi 0, %s159
      %s176 = sphi 0, %s160
    $region4: #{tpu_custom_call.1} parent=1 // loop_header_branch
      %18 = sbr.rel (%p16) target = $region8
    $region5: #{tpu_custom_call.1} parent=1 // loop_body
      %s20 = ssub.s32 %s15, 1
      %s21 = ssub.s32 %s15, 2
      %s22 = sadd.s32 %s15, 1
      %s23 = ssub.s32 %s15, %s22
      %p24 = scmp.eq.s32.totalorder %s23, 0
      %s26 = sadd.s32 %s25, 1
      %s27 = scalar_select %p24, %s25, %s26
      %p30 = pneg %p24
      %p31 = scmp.eq.s32.totalorder %s15, 1
      %p32 = por %p30, %p31
      %p33 = scmp.ne.s32.totalorder %s25, %s28
      %p34 = scmp.eq.s32.totalorder %s15, 0
      %p35 = por %p33, %p34
      %p36 = scmp.ne.s32.totalorder %s25, %s28
      %p37 = scmp.eq.s32.totalorder %s20, 1
      %p38 = por %p36, %p37
      %p39 = scmp.ne.s32.totalorder %s28, %s29
      %p40 = scmp.eq.s32.totalorder %s20, 0
      %p41 = por %p39, %p40
      %p42 = scmp.ne.s32.totalorder %s28, %s29
      %p43 = scmp.eq.s32.totalorder %s21, 1
      %p44 = por %p42, %p43
      %p46 = scmp.ne.s32.totalorder %s29, %s45
      %p47 = scmp.eq.s32.totalorder %s21, 0
      %p48 = por %p46, %p47
      %s50 = sadd.s32 %s49, 1
      %p53 = scmp.eq.s32.totalorder %s15, 1
      %p54 = scmp.ne.s32.totalorder %s49, %s51
      %p55 = scmp.eq.s32.totalorder %s15, 0
      %p56 = por %p54, %p55
      %p57 = scmp.ne.s32.totalorder %s49, %s51
      %p58 = scmp.eq.s32.totalorder %s20, 1
      %p59 = por %p57, %p58
      %p60 = scmp.ne.s32.totalorder %s51, %s52
      %p61 = scmp.eq.s32.totalorder %s20, 0
      %p62 = por %p60, %p61
      %p63 = scmp.ne.s32.totalorder %s51, %s52
      %p64 = scmp.eq.s32.totalorder %s21, 1
      %p65 = por %p63, %p64
      %p67 = scmp.ne.s32.totalorder %s52, %s66
      %p68 = scmp.eq.s32.totalorder %s21, 0
      %p69 = por %p67, %p68
      %s71 = sadd.s32 %s70, 1
      %p74 = scmp.eq.s32.totalorder %s15, 1
      %p75 = scmp.ne.s32.totalorder %s70, %s72
      %p76 = scmp.eq.s32.totalorder %s15, 0
      %p77 = por %p75, %p76
      %p78 = scmp.ne.s32.totalorder %s70, %s72
      %p79 = scmp.eq.s32.totalorder %s20, 1
      %p80 = por %p78, %p79
      %p81 = scmp.ne.s32.totalorder %s72, %s73
      %p82 = scmp.eq.s32.totalorder %s20, 0
      %p83 = por %p81, %p82
      %p84 = scmp.ne.s32.totalorder %s72, %s73
      %p85 = scmp.eq.s32.totalorder %s21, 1
      %p86 = por %p84, %p85
      %p88 = scmp.ne.s32.totalorder %s73, %s87
      %p89 = scmp.eq.s32.totalorder %s21, 0
      %p90 = por %p88, %p89
      %s92 = sadd.s32 %s91, 1
      %p95 = scmp.eq.s32.totalorder %s15, 1
      %p96 = scmp.ne.s32.totalorder %s91, %s93
      %p97 = scmp.eq.s32.totalorder %s15, 0
      %p98 = por %p96, %p97
      %p99 = scmp.ne.s32.totalorder %s91, %s93
      %p100 = scmp.eq.s32.totalorder %s20, 1
      %p101 = por %p99, %p100
      %p102 = scmp.ne.s32.totalorder %s93, %s94
      %p103 = scmp.eq.s32.totalorder %s20, 0
      %p104 = por %p102, %p103
      %p105 = scmp.ne.s32.totalorder %s93, %s94
      %p106 = scmp.eq.s32.totalorder %s21, 1
      %p107 = por %p105, %p106
      %p109 = scmp.ne.s32.totalorder %s94, %s108
      %p110 = scmp.eq.s32.totalorder %s21, 0
      %p111 = por %p109, %p110
      %s113 = sadd.s32 %s112, 1
      %p116 = scmp.eq.s32.totalorder %s15, 1
      %p117 = scmp.ne.s32.totalorder %s112, %s114
      %p118 = scmp.eq.s32.totalorder %s15, 0
      %p119 = por %p117, %p118
      %p120 = scmp.ne.s32.totalorder %s112, %s114
      %p121 = scmp.eq.s32.totalorder %s20, 1
      %p122 = por %p120, %p121
      %p123 = scmp.ne.s32.totalorder %s114, %s115
      %p124 = scmp.eq.s32.totalorder %s20, 0
      %p125 = por %p123, %p124
      %p126 = scmp.ne.s32.totalorder %s114, %s115
      %p127 = scmp.eq.s32.totalorder %s21, 1
      %p128 = por %p126, %p127
      %p130 = scmp.ne.s32.totalorder %s115, %s129
      %p131 = scmp.eq.s32.totalorder %s21, 0
      %p132 = por %p130, %p131
      %s134 = sadd.s32 %s133, 1
      %p137 = scmp.eq.s32.totalorder %s15, 1
      %p138 = scmp.ne.s32.totalorder %s133, %s135
      %p139 = scmp.eq.s32.totalorder %s15, 0
      %p140 = por %p138, %p139
      %p141 = scmp.ne.s32.totalorder %s133, %s135
      %p142 = scmp.eq.s32.totalorder %s20, 1
      %p143 = por %p141, %p142
      %p144 = scmp.ne.s32.totalorder %s135, %s136
      %p145 = scmp.eq.s32.totalorder %s20, 0
      %p146 = por %p144, %p145
      %p147 = scmp.ne.s32.totalorder %s135, %s136
      %p148 = scmp.eq.s32.totalorder %s21, 1
      %p149 = por %p147, %p148
      %p151 = scmp.ne.s32.totalorder %s136, %s150
      %p152 = scmp.eq.s32.totalorder %s21, 0
      %p153 = por %p151, %p152
      %s154 = ssub.s32 %s15, %s22
      %p155 = scmp.eq.s32.totalorder %s154, 0
      %s157 = sadd.s32 %s156, 1
      %s158 = scalar_select %p155, %s156, %s157
      %p161 = pneg %p155
      %p162 = scmp.eq.s32.totalorder %s15, 1
      %p163 = por %p161, %p162
      %p164 = scmp.ne.s32.totalorder %s156, %s159
      %p165 = scmp.eq.s32.totalorder %s15, 0
      %p166 = por %p164, %p165
      %p167 = scmp.ne.s32.totalorder %s156, %s159
      %p168 = scmp.eq.s32.totalorder %s20, 1
      %p169 = por %p167, %p168
      %p170 = scmp.ne.s32.totalorder %s159, %s160
      %p171 = scmp.eq.s32.totalorder %s20, 0
      %p172 = por %p170, %p171
      %p173 = scmp.ne.s32.totalorder %s159, %s160
      %p174 = scmp.eq.s32.totalorder %s21, 1
      %p175 = por %p173, %p174
      %p177 = scmp.ne.s32.totalorder %s160, %s176
      %p178 = scmp.eq.s32.totalorder %s21, 0
      %p179 = por %p177, %p178
      %p180 = scmp.le.s32.totalorder 1, %s15
      %p181 = scmp.lt.s32.totalorder %s15, 3
      %p182 = pnand %p180, %p181
      %p183 = pneg %p182
      // Predicated region
      $region9: #{tpu_custom_call.1} parent=5 // pred_check
        _
      $region10: #{tpu_custom_call.1} parent=5 // pred_check_branch
        %185 = sbr.rel (%p182) target = $region12
      $region11: #{tpu_custom_call.1} parent=5 // pred_region
        %s186 = ssub.s32 %s15, 1
        // Predicated region
        $region13: #{tpu_custom_call.1} parent=11 // pred_check
          %p187 = pneg %p62
        $region14: #{tpu_custom_call.1} parent=11 // pred_check_branch
          %189 = sbr.rel (%p187) target = $region16
        $region15: #{tpu_custom_call.1} parent=11 // pred_region
          _
        $region16: #{tpu_custom_call.1} parent=11 // pred_fallthru
          _
        // Predicated region
        $region17: #{tpu_custom_call.1} parent=11 // pred_check
          %p190 = pneg %p83
        $region18: #{tpu_custom_call.1} parent=11 // pred_check_branch
          %192 = sbr.rel (%p190) target = $region20
        $region19: #{tpu_custom_call.1} parent=11 // pred_region
          _
        $region20: #{tpu_custom_call.1} parent=11 // pred_fallthru
          _
        // Predicated region
        $region21: #{tpu_custom_call.1} parent=11 // pred_check
          %p193 = pneg %p104
        $region22: #{tpu_custom_call.1} parent=11 // pred_check_branch
          %195 = sbr.rel (%p193) target = $region24
        $region23: #{tpu_custom_call.1} parent=11 // pred_region
          _
        $region24: #{tpu_custom_call.1} parent=11 // pred_fallthru
          _
        // Predicated region
        $region25: #{tpu_custom_call.1} parent=11 // pred_check
          %p196 = pneg %p125
        $region26: #{tpu_custom_call.1} parent=11 // pred_check_branch
          %198 = sbr.rel (%p196) target = $region28
        $region27: #{tpu_custom_call.1} parent=11 // pred_region
          _
        $region28: #{tpu_custom_call.1} parent=11 // pred_fallthru
          _
        // Predicated region
        $region29: #{tpu_custom_call.1} parent=11 // pred_check
          %p199 = pneg %p146
        $region30: #{tpu_custom_call.1} parent=11 // pred_check_branch
          %201 = sbr.rel (%p199) target = $region32
        $region31: #{tpu_custom_call.1} parent=11 // pred_region
          _
        $region32: #{tpu_custom_call.1} parent=11 // pred_fallthru
          _
      $region12: #{tpu_custom_call.1} parent=5 // pred_fallthru
        _
      %p202 = scmp.lt.s32.totalorder %s15, 2
      // Predicated region
      $region33: #{tpu_custom_call.1} parent=5 // pred_check
        %p203 = pneg %p202
      $region34: #{tpu_custom_call.1} parent=5 // pred_check_branch
        %205 = sbr.rel (%p203) target = $region36
      $region35: #{tpu_custom_call.1} parent=5 // pred_region
        // Predicated region
        $region37: #{tpu_custom_call.1} parent=35 // pred_check
          %p206 = pneg %p35
        $region38: #{tpu_custom_call.1} parent=35 // pred_check_branch
          %208 = sbr.rel (%p206) target = $region40
        $region39: #{tpu_custom_call.1} parent=35 // pred_region
          %p209 = scmp.lt.s32.totalorder %s15, 1
          %s210 = scalar_select %p209, %s15, 1
          %s211 = smul.addr %s210, 8
          %s212 = scalar_lea.vmem %s0, %s211
        $region40: #{tpu_custom_call.1} parent=35 // pred_fallthru
          _
      $region36: #{tpu_custom_call.1} parent=5 // pred_fallthru
        _
      %p213 = scmp.le.s32.totalorder 1, %s15
      %p214 = scmp.lt.s32.totalorder %s15, 3
      %p215 = pnand %p213, %p214
      %p216 = pneg %p215
      // Predicated region
      $region41: #{tpu_custom_call.1} parent=5 // pred_check
        _
      $region42: #{tpu_custom_call.1} parent=5 // pred_check_branch
        %218 = sbr.rel (%p215) target = $region44
      $region43: #{tpu_custom_call.1} parent=5 // pred_region
        %s219 = ssub.s32 %s15, 1
        %p220 = scmp.lt.s32.totalorder %s20, 1
        %s221 = scalar_select %p220, %s20, 1
        %s222 = smul.addr %s221, 8
        %s223 = scalar_lea.vmem %s0, %s222
        %p224 = pneg %p41
        %p225 = pneg %p38
        %p226 = pneg %p62
        %p227 = pneg %p59
        %p228 = pneg %p83
        %p229 = pneg %p80
        %p230 = pneg %p104
        %p231 = pneg %p101
        %p232 = pneg %p125
        %p233 = pneg %p122
        %p234 = pneg %p146
        %p235 = pneg %p143
        %p236 = pneg %p172
        %p237 = pneg %p169
        %s238 = sand.u32 %s159, 1
        %s239 = scalar_lea.sflag [#allocation5], %s238
        %s240 = sand.u32 %s159, 1
        %s241 = smul.addr %s240, 8
        %s242 = scalar_lea.vmem [#allocation4], %s241
        %p243 = scmp.lt.s32.totalorder %s20, 1
        %s244 = scalar_select %p243, %s20, 1
        %s245 = smul.addr %s244, 8
        %s246 = scalar_lea.vmem %s0, %s245
        %v247 = vld [vmem:[%s246] sm:$0xff]
        %vm248 = vcmask 261120
        %v249 = vsel %vm248, %v247, 0.0
        %250 = vadd.xlane.f32.xlu0 %v249
        %v251 = vpop.xlane.xlu0 %250
        %v252 = vrcp.pop 32.0
        %v253 = vmul.f32 %v251, %v252
        %v254 = vsub.f32 %v247, %v253
        %v255 = vmul.f32 %v254, %v254
        %v256 = vsel %vm248, %v255, 0.0
        %257 = vadd.xlane.f32.xlu0 %v256
        %v258 = vpop.xlane.xlu0 %257
        %v259 = vmul.f32 %v258, %v252
        %v260 = vadd.f32 %v259, 1e-05
        %v261 = vrsqrt.pop %v260
        %v262 = vmul.f32 %v254, %v261
        %v263 = vld [vmem:[%s1] sm:$0x1]
        %v265 = vlaneseq
        %v266 = vshrl.u32 %v265, 7
        %v267 = vsub.s32 0, %v266
        %v268 = vrot.slane %v263, %v267
        %v270 = vmul.f32 %v262, %v268
        %v271 = vld [vmem:[%s2] sm:$0x1]
        %v273 = vlaneseq
        %v274 = vshrl.u32 %v273, 7
        %v275 = vsub.s32 0, %v274
        %v276 = vrot.slane %v271, %v275
        %v278 = vadd.f32 %v270, %v276
        %v279 = vld [vmem:[%s3] sm:$0xff]
        %v280 = vld [vmem:[%s3 + $0x8] sm:$0xff]
        %v281 = vld [vmem:[%s3 + $0x10] sm:$0xff]
        %v282 = vld [vmem:[%s3 + $0x18] sm:$0xff]
        %v283 = vld [vmem:[%s3 + $0x20] sm:$0xff]
        %v284 = vld [vmem:[%s3 + $0x28] sm:$0xff]
        %v285 = vld [vmem:[%s3 + $0x30] sm:$0xff]
        %v286 = vld [vmem:[%s3 + $0x38] sm:$0xff]
        %v288 = vsel %vm248, %v278, 0
        %290 = vmatprep.subr.mxu0 %v280
        %291 = vmatpush1.msra.mxu0 %v279
        %292 = vmatprep.subr.mxu0 %v282
        %293 = vmatpush1.msra.mxu0 %v281
        %294 = vmatprep.subr.mxu0 %v284
        %295 = vmatpush1.msra.mxu0 %v283
        %296 = vmatprep.subr.mxu0 %v286
        %297 = vmatpush1.msra.mxu0 %v285
        %298 = vmatprep.subr.mxu0 0.0
        %299 = vmatpush1.msra.mxu0 0.0
        %300 = vmatprep.subr.mxu0 0.0
        %301 = vmatpush1.msra.mxu0 0.0
        %302 = vmatprep.subr.mxu0 0.0
        %303 = vmatpush1.msra.mxu0 0.0
        %304 = vmatprep.subr.mxu0 0.0
        %305 = vmatpush1.msra.mxu0 0.0
        %306 = vmatprep.subr.mxu0 0.0
        %307 = vmatpush1.msra.mxu0 0.0
        %308 = vmatprep.subr.mxu0 0.0
        %309 = vmatpush1.msra.mxu0 0.0
        %310 = vmatprep.subr.mxu0 0.0
        %311 = vmatpush1.msra.mxu0 0.0
        %312 = vmatprep.subr.mxu0 0.0
        %313 = vmatpush1.msra.mxu0 0.0
        %314 = vmatprep.subr.mxu0 0.0
        %315 = vmatpush1.msra.mxu0 0.0
        %316 = vmatprep.subr.mxu0 0.0
        %317 = vmatpush1.msra.mxu0 0.0
        %318 = vmatprep.subr.mxu0 0.0
        %319 = vmatpush1.msra.mxu0 0.0
        %320 = vmatprep.subr.mxu0 0.0
        %321 = vmatpush1.msra.mxu0 0.0
        %322 = vmatprep.subr.mxu0 0.0
        %323 = vmatpush1.msra.mxu0 0.0
        %324 = vmatprep.subr.mxu0 0.0
        %325 = vmatpush1.msra.mxu0 0.0
        %326 = vmatprep.subr.mxu0 0.0
        %327 = vmatpush1.msra.mxu0 0.0
        %328 = vmatprep.subr.mxu0 0.0
        %329 = vmatpush1.msra.mxu0 0.0
        %330 = vmatprep.subr.mxu0 0.0
        %331 = vmatpush1.msra.mxu0 0.0
        %332 = vmatprep.subr.mxu0 0.0
        %333 = vmatpush1.msra.mxu0 0.0
        %334 = vmatprep.subr.mxu0 0.0
        %335 = vmatpush1.msra.mxu0 0.0
        %336 = vmatprep.subr.mxu0 0.0
        %337 = vmatpush1.msra.mxu0 0.0
        %338 = vmatprep.subr.mxu0 0.0
        %339 = vmatpush1.msra.mxu0 0.0
        %340 = vmatprep.subr.mxu0 0.0
        %341 = vmatpush1.msra.mxu0 0.0
        %342 = vmatprep.subr.mxu0 0.0
        %343 = vmatpush1.msra.mxu0 0.0
        %344 = vmatprep.subr.mxu0 0.0
        %345 = vmatpush1.msra.mxu0 0.0
        %346 = vmatprep.subr.mxu0 0.0
        %347 = vmatpush1.msra.mxu0 0.0
        %348 = vmatprep.subr.mxu0 0.0
        %349 = vmatpush1.msra.mxu0 0.0
        %350 = vmatprep.subr.mxu0 0.0
        %351 = vmatpush1.msra.mxu0 0.0
        %352 = vmatprep.subr.mxu0 0.0
        %353 = vmatpush1.msra.mxu0 0.0
        %354 = vmatprep.mubr.f32.mxu0 0.0
        %355 = vmatmul.mubr.f32.gmra.mrb[0].mxu0 %v288
        %v356 = vpop.f32.mrb[0].mxu0
        %v357 = vadd.f32 0.0, %v356
        %v358 = vpop.f32.mrb[0].mxu0
        %v359 = vadd.f32 0.0, %v358
        %360 = vdwg.mxu0
        %361 = vst [vmem:[#allocation2] sm:$0xff] %v357
        %vm362 = vcmask 523264
        %363 = vst.msk [vmem:[#allocation2 + $0x8] sm:$0xff] %vm362, %v359
        %v364 = vld [vmem:[#allocation2] sm:$0xff]
        %v365 = vld [vmem:[#allocation2 + $0x8] sm:$0xff]
        %367 = vrot.lane.b32.xlu0 %v364, 64
        %v368 = vpop.permute.xlu0 %367
        %vm369 = vcmask 130048
        %v370 = vsel %vm369, %v364, 0
        %v372 = vsel %vm369, %v368, 0
        %374 = vmatprep.subr.mxu0 0.0
        %375 = vmatpush1.xpose.msra.mxu0 %v372
        %376 = vmatprep.subr.mxu0 0.0
        %377 = vmatpush1.xpose.msra.mxu0 0.0
        %378 = vmatprep.subr.mxu0 0.0
        %379 = vmatpush1.xpose.msra.mxu0 0.0
        %380 = vmatprep.subr.mxu0 0.0
        %381 = vmatpush1.xpose.msra.mxu0 0.0
        %382 = vmatprep.subr.mxu0 0.0
        %383 = vmatpush1.xpose.msra.mxu0 0.0
        %384 = vmatprep.subr.mxu0 0.0
        %385 = vmatpush1.xpose.msra.mxu0 0.0
        %386 = vmatprep.subr.mxu0 0.0
        %387 = vmatpush1.xpose.msra.mxu0 0.0
        %388 = vmatprep.subr.mxu0 0.0
        %389 = vmatpush1.xpose.msra.mxu0 0.0
        %390 = vmatprep.subr.mxu0 0.0
        %391 = vmatpush1.xpose.msra.mxu0 0.0
        %392 = vmatprep.subr.mxu0 0.0
        %393 = vmatpush1.xpose.msra.mxu0 0.0
        %394 = vmatprep.subr.mxu0 0.0
        %395 = vmatpush1.xpose.msra.mxu0 0.0
        %396 = vmatprep.subr.mxu0 0.0
        %397 = vmatpush1.xpose.msra.mxu0 0.0
        %398 = vmatprep.subr.mxu0 0.0
        %399 = vmatpush1.xpose.msra.mxu0 0.0
        %400 = vmatprep.subr.mxu0 0.0
        %401 = vmatpush1.xpose.msra.mxu0 0.0
        %402 = vmatprep.subr.mxu0 0.0
        %403 = vmatpush1.xpose.msra.mxu0 0.0
        %404 = vmatprep.subr.mxu0 0.0
        %405 = vmatpush1.xpose.msra.mxu0 0.0
        %406 = vmatprep.subr.mxu0 0.0
        %407 = vmatpush1.xpose.msra.mxu0 0.0
        %408 = vmatprep.subr.mxu0 0.0
        %409 = vmatpush1.xpose.msra.mxu0 0.0
        %410 = vmatprep.subr.mxu0 0.0
        %411 = vmatpush1.xpose.msra.mxu0 0.0
        %412 = vmatprep.subr.mxu0 0.0
        %413 = vmatpush1.xpose.msra.mxu0 0.0
        %414 = vmatprep.subr.mxu0 0.0
        %415 = vmatpush1.xpose.msra.mxu0 0.0
        %416 = vmatprep.subr.mxu0 0.0
        %417 = vmatpush1.xpose.msra.mxu0 0.0
        %418 = vmatprep.subr.mxu0 0.0
        %419 = vmatpush1.xpose.msra.mxu0 0.0
        %420 = vmatprep.subr.mxu0 0.0
        %421 = vmatpush1.xpose.msra.mxu0 0.0
        %422 = vmatprep.subr.mxu0 0.0
        %423 = vmatpush1.xpose.msra.mxu0 0.0
        %424 = vmatprep.subr.mxu0 0.0
        %425 = vmatpush1.xpose.msra.mxu0 0.0
        %426 = vmatprep.subr.mxu0 0.0
        %427 = vmatpush1.xpose.msra.mxu0 0.0
        %428 = vmatprep.subr.mxu0 0.0
        %429 = vmatpush1.xpose.msra.mxu0 0.0
        %430 = vmatprep.subr.mxu0 0.0
        %431 = vmatpush1.xpose.msra.mxu0 0.0
        %432 = vmatprep.subr.mxu0 0.0
        %433 = vmatpush1.xpose.msra.mxu0 0.0
        %434 = vmatprep.subr.mxu0 0.0
        %435 = vmatpush1.xpose.msra.mxu0 0.0
        %436 = vmatprep.subr.mxu0 0.0
        %437 = vmatpush1.xpose.msra.mxu0 0.0
        %438 = vmatprep.mubr.f32.mxu0 0.0
        %439 = vmatmul.mubr.f32.gmra.mrb[0].mxu0 %v370
        %v440 = vpop.f32.mrb[0].mxu0
        %v441 = vadd.f32 0.0, %v440
        %v442 = vpop.f32.mrb[0].mxu0
        %443 = vdwg.mxu0
        %vm444 = vcmask 64512
        %v445 = vsel %vm444, %v441, -inf
        %446 = vmax.xlane.f32.xlu0 %v445
        %v447 = vpop.xlane.xlu0 %446
        %v448 = vsub.f32 %v441, %v447
        %v449 = vmul.f32 %v448, 1.442695
        %v450 = vpow.pop %v449
        %v451 = vsel %vm444, %v450, 0.0
        %452 = vadd.xlane.f32.xlu0 %v451
        %v453 = vpop.xlane.xlu0 %452
        %v455 = vsel %vm444, %v450, 0
        %457 = vmatprep.subr.mxu0 0.0
        %458 = vmatpush1.msra.mxu0 %v365
        %459 = vmatprep.subr.mxu0 0.0
        %460 = vmatpush1.msra.mxu0 0.0
        %461 = vmatprep.subr.mxu0 0.0
        %462 = vmatpush1.msra.mxu0 0.0
        %463 = vmatprep.subr.mxu0 0.0
        %464 = vmatpush1.msra.mxu0 0.0
        %465 = vmatprep.subr.mxu0 0.0
        %466 = vmatpush1.msra.mxu0 0.0
        %467 = vmatprep.subr.mxu0 0.0
        %468 = vmatpush1.msra.mxu0 0.0
        %469 = vmatprep.subr.mxu0 0.0
        %470 = vmatpush1.msra.mxu0 0.0
        %471 = vmatprep.subr.mxu0 0.0
        %472 = vmatpush1.msra.mxu0 0.0
        %473 = vmatprep.subr.mxu0 0.0
        %474 = vmatpush1.msra.mxu0 0.0
        %475 = vmatprep.subr.mxu0 0.0
        %476 = vmatpush1.msra.mxu0 0.0
        %477 = vmatprep.subr.mxu0 0.0
        %478 = vmatpush1.msra.mxu0 0.0
        %479 = vmatprep.subr.mxu0 0.0
        %480 = vmatpush1.msra.mxu0 0.0
        %481 = vmatprep.subr.mxu0 0.0
        %482 = vmatpush1.msra.mxu0 0.0
        %483 = vmatprep.subr.mxu0 0.0
        %484 = vmatpush1.msra.mxu0 0.0
        %485 = vmatprep.subr.mxu0 0.0
        %486 = vmatpush1.msra.mxu0 0.0
        %487 = vmatprep.subr.mxu0 0.0
        %488 = vmatpush1.msra.mxu0 0.0
        %489 = vmatprep.subr.mxu0 0.0
        %490 = vmatpush1.msra.mxu0 0.0
        %491 = vmatprep.subr.mxu0 0.0
        %492 = vmatpush1.msra.mxu0 0.0
        %493 = vmatprep.subr.mxu0 0.0
        %494 = vmatpush1.msra.mxu0 0.0
        %495 = vmatprep.subr.mxu0 0.0
        %496 = vmatpush1.msra.mxu0 0.0
        %497 = vmatprep.subr.mxu0 0.0
        %498 = vmatpush1.msra.mxu0 0.0
        %499 = vmatprep.subr.mxu0 0.0
        %500 = vmatpush1.msra.mxu0 0.0
        %501 = vmatprep.subr.mxu0 0.0
        %502 = vmatpush1.msra.mxu0 0.0
        %503 = vmatprep.subr.mxu0 0.0
        %504 = vmatpush1.msra.mxu0 0.0
        %505 = vmatprep.subr.mxu0 0.0
        %506 = vmatpush1.msra.mxu0 0.0
        %507 = vmatprep.subr.mxu0 0.0
        %508 = vmatpush1.msra.mxu0 0.0
        %509 = vmatprep.subr.mxu0 0.0
        %510 = vmatpush1.msra.mxu0 0.0
        %511 = vmatprep.subr.mxu0 0.0
        %512 = vmatpush1.msra.mxu0 0.0
        %513 = vmatprep.subr.mxu0 0.0
        %514 = vmatpush1.msra.mxu0 0.0
        %515 = vmatprep.subr.mxu0 0.0
        %516 = vmatpush1.msra.mxu0 0.0
        %517 = vmatprep.subr.mxu0 0.0
        %518 = vmatpush1.msra.mxu0 0.0
        %519 = vmatprep.subr.mxu0 0.0
        %520 = vmatpush1.msra.mxu0 0.0
        %521 = vmatprep.mubr.f32.mxu0 0.0
        %522 = vmatmul.mubr.f32.gmra.mrb[0].mxu0 %v455
        %v523 = vpop.f32.mrb[0].mxu0
        %v524 = vadd.f32 0.0, %v523
        %v525 = vpop.f32.mrb[0].mxu0
        %526 = vdwg.mxu0
        %v527 = vrcp.pop %v453
        %v528 = vmul.f32 %v524, %v527
        %529 = vst.msk [vmem:[#allocation3] sm:$0xff] %vm369, %v528
        %v530 = vld [vmem:[#allocation2] sm:$0xff]
        %v531 = vld [vmem:[#allocation2 + $0x8] sm:$0xff]
        %533 = vrot.lane.b32.xlu0 %v530, 112
        %v534 = vpop.permute.xlu0 %533
        %535 = vrot.lane.b32.xlu0 %v530, 48
        %v536 = vpop.permute.xlu0 %535
        %v537 = vsel %vm369, %v534, 0
        %v539 = vsel %vm369, %v536, 0
        %541 = vmatprep.subr.mxu0 0.0
        %542 = vmatpush1.xpose.msra.mxu0 %v539
        %543 = vmatprep.subr.mxu0 0.0
        %544 = vmatpush1.xpose.msra.mxu0 0.0
        %545 = vmatprep.subr.mxu0 0.0
        %546 = vmatpush1.xpose.msra.mxu0 0.0
        %547 = vmatprep.subr.mxu0 0.0
        %548 = vmatpush1.xpose.msra.mxu0 0.0
        %549 = vmatprep.subr.mxu0 0.0
        %550 = vmatpush1.xpose.msra.mxu0 0.0
        %551 = vmatprep.subr.mxu0 0.0
        %552 = vmatpush1.xpose.msra.mxu0 0.0
        %553 = vmatprep.subr.mxu0 0.0
        %554 = vmatpush1.xpose.msra.mxu0 0.0
        %555 = vmatprep.subr.mxu0 0.0
        %556 = vmatpush1.xpose.msra.mxu0 0.0
        %557 = vmatprep.subr.mxu0 0.0
        %558 = vmatpush1.xpose.msra.mxu0 0.0
        %559 = vmatprep.subr.mxu0 0.0
        %560 = vmatpush1.xpose.msra.mxu0 0.0
        %561 = vmatprep.subr.mxu0 0.0
        %562 = vmatpush1.xpose.msra.mxu0 0.0
        %563 = vmatprep.subr.mxu0 0.0
        %564 = vmatpush1.xpose.msra.mxu0 0.0
        %565 = vmatprep.subr.mxu0 0.0
        %566 = vmatpush1.xpose.msra.mxu0 0.0
        %567 = vmatprep.subr.mxu0 0.0
        %568 = vmatpush1.xpose.msra.mxu0 0.0
        %569 = vmatprep.subr.mxu0 0.0
        %570 = vmatpush1.xpose.msra.mxu0 0.0
        %571 = vmatprep.subr.mxu0 0.0
        %572 = vmatpush1.xpose.msra.mxu0 0.0
        %573 = vmatprep.subr.mxu0 0.0
        %574 = vmatpush1.xpose.msra.mxu0 0.0
        %575 = vmatprep.subr.mxu0 0.0
        %576 = vmatpush1.xpose.msra.mxu0 0.0
        %577 = vmatprep.subr.mxu0 0.0
        %578 = vmatpush1.xpose.msra.mxu0 0.0
        %579 = vmatprep.subr.mxu0 0.0
        %580 = vmatpush1.xpose.msra.mxu0 0.0
        %581 = vmatprep.subr.mxu0 0.0
        %582 = vmatpush1.xpose.msra.mxu0 0.0
        %583 = vmatprep.subr.mxu0 0.0
        %584 = vmatpush1.xpose.msra.mxu0 0.0
        %585 = vmatprep.subr.mxu0 0.0
        %586 = vmatpush1.xpose.msra.mxu0 0.0
        %587 = vmatprep.subr.mxu0 0.0
        %588 = vmatpush1.xpose.msra.mxu0 0.0
        %589 = vmatprep.subr.mxu0 0.0
        %590 = vmatpush1.xpose.msra.mxu0 0.0
        %591 = vmatprep.subr.mxu0 0.0
        %592 = vmatpush1.xpose.msra.mxu0 0.0
        %593 = vmatprep.subr.mxu0 0.0
        %594 = vmatpush1.xpose.msra.mxu0 0.0
        %595 = vmatprep.subr.mxu0 0.0
        %596 = vmatpush1.xpose.msra.mxu0 0.0
        %597 = vmatprep.subr.mxu0 0.0
        %598 = vmatpush1.xpose.msra.mxu0 0.0
        %599 = vmatprep.subr.mxu0 0.0
        %600 = vmatpush1.xpose.msra.mxu0 0.0
        %601 = vmatprep.subr.mxu0 0.0
        %602 = vmatpush1.xpose.msra.mxu0 0.0
        %603 = vmatprep.subr.mxu0 0.0
        %604 = vmatpush1.xpose.msra.mxu0 0.0
        %605 = vmatprep.mubr.f32.mxu0 0.0
        %606 = vmatmul.mubr.f32.gmra.mrb[0].mxu0 %v537
        %v607 = vpop.f32.mrb[0].mxu0
        %v608 = vadd.f32 0.0, %v607
        %v609 = vpop.f32.mrb[0].mxu0
        %610 = vdwg.mxu0
        %v611 = vsel %vm444, %v608, -inf
        %612 = vmax.xlane.f32.xlu0 %v611
        %v613 = vpop.xlane.xlu0 %612
        %v614 = vsub.f32 %v608, %v613
        %v615 = vmul.f32 %v614, 1.442695
        %v616 = vpow.pop %v615
        %v617 = vsel %vm444, %v616, 0.0
        %618 = vadd.xlane.f32.xlu0 %v617
        %v619 = vpop.xlane.xlu0 %618
        %621 = vrot.lane.b32.xlu0 %v531, 112
        %v622 = vpop.permute.xlu0 %621
        %v625 = vsel %vm444, %v616, 0
        %627 = vmatprep.subr.mxu0 0.0
        %628 = vmatpush1.msra.mxu0 %v622
        %629 = vmatprep.subr.mxu0 0.0
        %630 = vmatpush1.msra.mxu0 0.0
        %631 = vmatprep.subr.mxu0 0.0
        %632 = vmatpush1.msra.mxu0 0.0
        %633 = vmatprep.subr.mxu0 0.0
        %634 = vmatpush1.msra.mxu0 0.0
        %635 = vmatprep.subr.mxu0 0.0
        %636 = vmatpush1.msra.mxu0 0.0
        %637 = vmatprep.subr.mxu0 0.0
        %638 = vmatpush1.msra.mxu0 0.0
        %639 = vmatprep.subr.mxu0 0.0
        %640 = vmatpush1.msra.mxu0 0.0
        %641 = vmatprep.subr.mxu0 0.0
        %642 = vmatpush1.msra.mxu0 0.0
        %643 = vmatprep.subr.mxu0 0.0
        %644 = vmatpush1.msra.mxu0 0.0
        %645 = vmatprep.subr.mxu0 0.0
        %646 = vmatpush1.msra.mxu0 0.0
        %647 = vmatprep.subr.mxu0 0.0
        %648 = vmatpush1.msra.mxu0 0.0
        %649 = vmatprep.subr.mxu0 0.0
        %650 = vmatpush1.msra.mxu0 0.0
        %651 = vmatprep.subr.mxu0 0.0
        %652 = vmatpush1.msra.mxu0 0.0
        %653 = vmatprep.subr.mxu0 0.0
        %654 = vmatpush1.msra.mxu0 0.0
        %655 = vmatprep.subr.mxu0 0.0
        %656 = vmatpush1.msra.mxu0 0.0
        %657 = vmatprep.subr.mxu0 0.0
        %658 = vmatpush1.msra.mxu0 0.0
        %659 = vmatprep.subr.mxu0 0.0
        %660 = vmatpush1.msra.mxu0 0.0
        %661 = vmatprep.subr.mxu0 0.0
        %662 = vmatpush1.msra.mxu0 0.0
        %663 = vmatprep.subr.mxu0 0.0
        %664 = vmatpush1.msra.mxu0 0.0
        %665 = vmatprep.subr.mxu0 0.0
        %666 = vmatpush1.msra.mxu0 0.0
        %667 = vmatprep.subr.mxu0 0.0
        %668 = vmatpush1.msra.mxu0 0.0
        %669 = vmatprep.subr.mxu0 0.0
        %670 = vmatpush1.msra.mxu0 0.0
        %671 = vmatprep.subr.mxu0 0.0
        %672 = vmatpush1.msra.mxu0 0.0
        %673 = vmatprep.subr.mxu0 0.0
        %674 = vmatpush1.msra.mxu0 0.0
        %675 = vmatprep.subr.mxu0 0.0
        %676 = vmatpush1.msra.mxu0 0.0
        %677 = vmatprep.subr.mxu0 0.0
        %678 = vmatpush1.msra.mxu0 0.0
        %679 = vmatprep.subr.mxu0 0.0
        %680 = vmatpush1.msra.mxu0 0.0
        %681 = vmatprep.subr.mxu0 0.0
        %682 = vmatpush1.msra.mxu0 0.0
        %683 = vmatprep.subr.mxu0 0.0
        %684 = vmatpush1.msra.mxu0 0.0
        %685 = vmatprep.subr.mxu0 0.0
        %686 = vmatpush1.msra.mxu0 0.0
        %687 = vmatprep.subr.mxu0 0.0
        %688 = vmatpush1.msra.mxu0 0.0
        %689 = vmatprep.subr.mxu0 0.0
        %690 = vmatpush1.msra.mxu0 0.0
        %691 = vmatprep.mubr.f32.mxu0 0.0
        %692 = vmatmul.mubr.f32.gmra.mrb[0].mxu0 %v625
        %v693 = vpop.f32.mrb[0].mxu0
        %v694 = vadd.f32 0.0, %v693
        %v695 = vpop.f32.mrb[0].mxu0
        %696 = vdwg.mxu0
        %v697 = vrcp.pop %v619
        %v698 = vmul.f32 %v694, %v697
        %700 = vrot.lane.b32.xlu0 %v698, 16
        %v701 = vpop.permute.xlu0 %700
        %vm703 = vcmask 261248
        %704 = vst.msk [vmem:[#allocation3] sm:$0xff] %vm703, %v701
        %v705 = vld [vmem:[#allocation2] sm:$0xff]
        %v706 = vld [vmem:[#allocation2 + $0x8] sm:$0xff]
        %708 = vrot.lane.b32.xlu0 %v705, 96
        %v709 = vpop.permute.xlu0 %708
        %710 = vrot.lane.b32.xlu0 %v705, 32
        %v711 = vpop.permute.xlu0 %710
        %v712 = vsel %vm369, %v709, 0
        %v714 = vsel %vm369, %v711, 0
        %716 = vmatprep.subr.mxu0 0.0
        %717 = vmatpush1.xpose.msra.mxu0 %v714
        %718 = vmatprep.subr.mxu0 0.0
        %719 = vmatpush1.xpose.msra.mxu0 0.0
        %720 = vmatprep.subr.mxu0 0.0
        %721 = vmatpush1.xpose.msra.mxu0 0.0
        %722 = vmatprep.subr.mxu0 0.0
        %723 = vmatpush1.xpose.msra.mxu0 0.0
        %724 = vmatprep.subr.mxu0 0.0
        %725 = vmatpush1.xpose.msra.mxu0 0.0
        %726 = vmatprep.subr.mxu0 0.0
        %727 = vmatpush1.xpose.msra.mxu0 0.0
        %728 = vmatprep.subr.mxu0 0.0
        %729 = vmatpush1.xpose.msra.mxu0 0.0
        %730 = vmatprep.subr.mxu0 0.0
        %731 = vmatpush1.xpose.msra.mxu0 0.0
        %732 = vmatprep.subr.mxu0 0.0
        %733 = vmatpush1.xpose.msra.mxu0 0.0
        %734 = vmatprep.subr.mxu0 0.0
        %735 = vmatpush1.xpose.msra.mxu0 0.0
        %736 = vmatprep.subr.mxu0 0.0
        %737 = vmatpush1.xpose.msra.mxu0 0.0
        %738 = vmatprep.subr.mxu0 0.0
        %739 = vmatpush1.xpose.msra.mxu0 0.0
        %740 = vmatprep.subr.mxu0 0.0
        %741 = vmatpush1.xpose.msra.mxu0 0.0
        %742 = vmatprep.subr.mxu0 0.0
        %743 = vmatpush1.xpose.msra.mxu0 0.0
        %744 = vmatprep.subr.mxu0 0.0
        %745 = vmatpush1.xpose.msra.mxu0 0.0
        %746 = vmatprep.subr.mxu0 0.0
        %747 = vmatpush1.xpose.msra.mxu0 0.0
        %748 = vmatprep.subr.mxu0 0.0
        %749 = vmatpush1.xpose.msra.mxu0 0.0
        %750 = vmatprep.subr.mxu0 0.0
        %751 = vmatpush1.xpose.msra.mxu0 0.0
        %752 = vmatprep.subr.mxu0 0.0
        %753 = vmatpush1.xpose.msra.mxu0 0.0
        %754 = vmatprep.subr.mxu0 0.0
        %755 = vmatpush1.xpose.msra.mxu0 0.0
        %756 = vmatprep.subr.mxu0 0.0
        %757 = vmatpush1.xpose.msra.mxu0 0.0
        %758 = vmatprep.subr.mxu0 0.0
        %759 = vmatpush1.xpose.msra.mxu0 0.0
        %760 = vmatprep.subr.mxu0 0.0
        %761 = vmatpush1.xpose.msra.mxu0 0.0
        %762 = vmatprep.subr.mxu0 0.0
        %763 = vmatpush1.xpose.msra.mxu0 0.0
        %764 = vmatprep.subr.mxu0 0.0
        %765 = vmatpush1.xpose.msra.mxu0 0.0
        %766 = vmatprep.subr.mxu0 0.0
        %767 = vmatpush1.xpose.msra.mxu0 0.0
        %768 = vmatprep.subr.mxu0 0.0
        %769 = vmatpush1.xpose.msra.mxu0 0.0
        %770 = vmatprep.subr.mxu0 0.0
        %771 = vmatpush1.xpose.msra.mxu0 0.0
        %772 = vmatprep.subr.mxu0 0.0
        %773 = vmatpush1.xpose.msra.mxu0 0.0
        %774 = vmatprep.subr.mxu0 0.0
        %775 = vmatpush1.xpose.msra.mxu0 0.0
        %776 = vmatprep.subr.mxu0 0.0
        %777 = vmatpush1.xpose.msra.mxu0 0.0
        %778 = vmatprep.subr.mxu0 0.0
        %779 = vmatpush1.xpose.msra.mxu0 0.0
        %780 = vmatprep.mubr.f32.mxu0 0.0
        %781 = vmatmul.mubr.f32.gmra.mrb[0].mxu0 %v712
        %v782 = vpop.f32.mrb[0].mxu0
        %v783 = vadd.f32 0.0, %v782
        %v784 = vpop.f32.mrb[0].mxu0
        %785 = vdwg.mxu0
        %v786 = vsel %vm444, %v783, -inf
        %787 = vmax.xlane.f32.xlu0 %v786
        %v788 = vpop.xlane.xlu0 %787
        %v789 = vsub.f32 %v783, %v788
        %v790 = vmul.f32 %v789, 1.442695
        %v791 = vpow.pop %v790
        %v792 = vsel %vm444, %v791, 0.0
        %793 = vadd.xlane.f32.xlu0 %v792
        %v794 = vpop.xlane.xlu0 %793
        %796 = vrot.lane.b32.xlu0 %v706, 96
        %v797 = vpop.permute.xlu0 %796
        %v800 = vsel %vm444, %v791, 0
        %802 = vmatprep.subr.mxu0 0.0
        %803 = vmatpush1.msra.mxu0 %v797
        %804 = vmatprep.subr.mxu0 0.0
        %805 = vmatpush1.msra.mxu0 0.0
        %806 = vmatprep.subr.mxu0 0.0
        %807 = vmatpush1.msra.mxu0 0.0
        %808 = vmatprep.subr.mxu0 0.0
        %809 = vmatpush1.msra.mxu0 0.0
        %810 = vmatprep.subr.mxu0 0.0
        %811 = vmatpush1.msra.mxu0 0.0
        %812 = vmatprep.subr.mxu0 0.0
        %813 = vmatpush1.msra.mxu0 0.0
        %814 = vmatprep.subr.mxu0 0.0
        %815 = vmatpush1.msra.mxu0 0.0
        %816 = vmatprep.subr.mxu0 0.0
        %817 = vmatpush1.msra.mxu0 0.0
        %818 = vmatprep.subr.mxu0 0.0
        %819 = vmatpush1.msra.mxu0 0.0
        %820 = vmatprep.subr.mxu0 0.0
        %821 = vmatpush1.msra.mxu0 0.0
        %822 = vmatprep.subr.mxu0 0.0
        %823 = vmatpush1.msra.mxu0 0.0
        %824 = vmatprep.subr.mxu0 0.0
        %825 = vmatpush1.msra.mxu0 0.0
        %826 = vmatprep.subr.mxu0 0.0
        %827 = vmatpush1.msra.mxu0 0.0
        %828 = vmatprep.subr.mxu0 0.0
        %829 = vmatpush1.msra.mxu0 0.0
        %830 = vmatprep.subr.mxu0 0.0
        %831 = vmatpush1.msra.mxu0 0.0
        %832 = vmatprep.subr.mxu0 0.0
        %833 = vmatpush1.msra.mxu0 0.0
        %834 = vmatprep.subr.mxu0 0.0
        %835 = vmatpush1.msra.mxu0 0.0
        %836 = vmatprep.subr.mxu0 0.0
        %837 = vmatpush1.msra.mxu0 0.0
        %838 = vmatprep.subr.mxu0 0.0
        %839 = vmatpush1.msra.mxu0 0.0
        %840 = vmatprep.subr.mxu0 0.0
        %841 = vmatpush1.msra.mxu0 0.0
        %842 = vmatprep.subr.mxu0 0.0
        %843 = vmatpush1.msra.mxu0 0.0
        %844 = vmatprep.subr.mxu0 0.0
        %845 = vmatpush1.msra.mxu0 0.0
        %846 = vmatprep.subr.mxu0 0.0
        %847 = vmatpush1.msra.mxu0 0.0
        %848 = vmatprep.subr.mxu0 0.0
        %849 = vmatpush1.msra.mxu0 0.0
        %850 = vmatprep.subr.mxu0 0.0
        %851 = vmatpush1.msra.mxu0 0.0
        %852 = vmatprep.subr.mxu0 0.0
        %853 = vmatpush1.msra.mxu0 0.0
        %854 = vmatprep.subr.mxu0 0.0
        %855 = vmatpush1.msra.mxu0 0.0
        %856 = vmatprep.subr.mxu0 0.0
        %857 = vmatpush1.msra.mxu0 0.0
        %858 = vmatprep.subr.mxu0 0.0
        %859 = vmatpush1.msra.mxu0 0.0
        %860 = vmatprep.subr.mxu0 0.0
        %861 = vmatpush1.msra.mxu0 0.0
        %862 = vmatprep.subr.mxu0 0.0
        %863 = vmatpush1.msra.mxu0 0.0
        %864 = vmatprep.subr.mxu0 0.0
        %865 = vmatpush1.msra.mxu0 0.0
        %866 = vmatprep.mubr.f32.mxu0 0.0
        %867 = vmatmul.mubr.f32.gmra.mrb[0].mxu0 %v800
        %v868 = vpop.f32.mrb[0].mxu0
        %v869 = vadd.f32 0.0, %v868
        %v870 = vpop.f32.mrb[0].mxu0
        %871 = vdwg.mxu0
        %v872 = vrcp.pop %v794
        %v873 = vmul.f32 %v869, %v872
        %875 = vrot.lane.b32.xlu0 %v873, 32
        %v876 = vpop.permute.xlu0 %875
        %vm878 = vcmask 392448
        %879 = vst.msk [vmem:[#allocation3] sm:$0xff] %vm878, %v876
        %v880 = vld [vmem:[#allocation2] sm:$0xff]
        %v881 = vld [vmem:[#allocation2 + $0x8] sm:$0xff]
        %883 = vrot.lane.b32.xlu0 %v880, 80
        %v884 = vpop.permute.xlu0 %883
        %885 = vrot.lane.b32.xlu0 %v880, 16
        %v886 = vpop.permute.xlu0 %885
        %v887 = vsel %vm369, %v884, 0
        %v889 = vsel %vm369, %v886, 0
        %891 = vmatprep.subr.mxu0 0.0
        %892 = vmatpush1.xpose.msra.mxu0 %v889
        %893 = vmatprep.subr.mxu0 0.0
        %894 = vmatpush1.xpose.msra.mxu0 0.0
        %895 = vmatprep.subr.mxu0 0.0
        %896 = vmatpush1.xpose.msra.mxu0 0.0
        %897 = vmatprep.subr.mxu0 0.0
        %898 = vmatpush1.xpose.msra.mxu0 0.0
        %899 = vmatprep.subr.mxu0 0.0
        %900 = vmatpush1.xpose.msra.mxu0 0.0
        %901 = vmatprep.subr.mxu0 0.0
        %902 = vmatpush1.xpose.msra.mxu0 0.0
        %903 = vmatprep.subr.mxu0 0.0
        %904 = vmatpush1.xpose.msra.mxu0 0.0
        %905 = vmatprep.subr.mxu0 0.0
        %906 = vmatpush1.xpose.msra.mxu0 0.0
        %907 = vmatprep.subr.mxu0 0.0
        %908 = vmatpush1.xpose.msra.mxu0 0.0
        %909 = vmatprep.subr.mxu0 0.0
        %910 = vmatpush1.xpose.msra.mxu0 0.0
        %911 = vmatprep.subr.mxu0 0.0
        %912 = vmatpush1.xpose.msra.mxu0 0.0
        %913 = vmatprep.subr.mxu0 0.0
        %914 = vmatpush1.xpose.msra.mxu0 0.0
        %915 = vmatprep.subr.mxu0 0.0
        %916 = vmatpush1.xpose.msra.mxu0 0.0
        %917 = vmatprep.subr.mxu0 0.0
        %918 = vmatpush1.xpose.msra.mxu0 0.0
        %919 = vmatprep.subr.mxu0 0.0
        %920 = vmatpush1.xpose.msra.mxu0 0.0
        %921 = vmatprep.subr.mxu0 0.0
        %922 = vmatpush1.xpose.msra.mxu0 0.0
        %923 = vmatprep.subr.mxu0 0.0
        %924 = vmatpush1.xpose.msra.mxu0 0.0
        %925 = vmatprep.subr.mxu0 0.0
        %926 = vmatpush1.xpose.msra.mxu0 0.0
        %927 = vmatprep.subr.mxu0 0.0
        %928 = vmatpush1.xpose.msra.mxu0 0.0
        %929 = vmatprep.subr.mxu0 0.0
        %930 = vmatpush1.xpose.msra.mxu0 0.0
        %931 = vmatprep.subr.mxu0 0.0
        %932 = vmatpush1.xpose.msra.mxu0 0.0
        %933 = vmatprep.subr.mxu0 0.0
        %934 = vmatpush1.xpose.msra.mxu0 0.0
        %935 = vmatprep.subr.mxu0 0.0
        %936 = vmatpush1.xpose.msra.mxu0 0.0
        %937 = vmatprep.subr.mxu0 0.0
        %938 = vmatpush1.xpose.msra.mxu0 0.0
        %939 = vmatprep.subr.mxu0 0.0
        %940 = vmatpush1.xpose.msra.mxu0 0.0
        %941 = vmatprep.subr.mxu0 0.0
        %942 = vmatpush1.xpose.msra.mxu0 0.0
        %943 = vmatprep.subr.mxu0 0.0
        %944 = vmatpush1.xpose.msra.mxu0 0.0
        %945 = vmatprep.subr.mxu0 0.0
        %946 = vmatpush1.xpose.msra.mxu0 0.0
        %947 = vmatprep.subr.mxu0 0.0
        %948 = vmatpush1.xpose.msra.mxu0 0.0
        %949 = vmatprep.subr.mxu0 0.0
        %950 = vmatpush1.xpose.msra.mxu0 0.0
        %951 = vmatprep.subr.mxu0 0.0
        %952 = vmatpush1.xpose.msra.mxu0 0.0
        %953 = vmatprep.subr.mxu0 0.0
        %954 = vmatpush1.xpose.msra.mxu0 0.0
        %955 = vmatprep.mubr.f32.mxu0 0.0
        %956 = vmatmul.mubr.f32.gmra.mrb[0].mxu0 %v887
        %v957 = vpop.f32.mrb[0].mxu0
        %v958 = vadd.f32 0.0, %v957
        %v959 = vpop.f32.mrb[0].mxu0
        %960 = vdwg.mxu0
        %v961 = vsel %vm444, %v958, -inf
        %962 = vmax.xlane.f32.xlu0 %v961
        %v963 = vpop.xlane.xlu0 %962
        %v964 = vsub.f32 %v958, %v963
        %v965 = vmul.f32 %v964, 1.442695
        %v966 = vpow.pop %v965
        %v967 = vsel %vm444, %v966, 0.0
        %968 = vadd.xlane.f32.xlu0 %v967
        %v969 = vpop.xlane.xlu0 %968
        %971 = vrot.lane.b32.xlu0 %v881, 80
        %v972 = vpop.permute.xlu0 %971
        %v975 = vsel %vm444, %v966, 0
        %977 = vmatprep.subr.mxu0 0.0
        %978 = vmatpush1.msra.mxu0 %v972
        %979 = vmatprep.subr.mxu0 0.0
        %980 = vmatpush1.msra.mxu0 0.0
        %981 = vmatprep.subr.mxu0 0.0
        %982 = vmatpush1.msra.mxu0 0.0
        %983 = vmatprep.subr.mxu0 0.0
        %984 = vmatpush1.msra.mxu0 0.0
        %985 = vmatprep.subr.mxu0 0.0
        %986 = vmatpush1.msra.mxu0 0.0
        %987 = vmatprep.subr.mxu0 0.0
        %988 = vmatpush1.msra.mxu0 0.0
        %989 = vmatprep.subr.mxu0 0.0
        %990 = vmatpush1.msra.mxu0 0.0
        %991 = vmatprep.subr.mxu0 0.0
        %992 = vmatpush1.msra.mxu0 0.0
        %993 = vmatprep.subr.mxu0 0.0
        %994 = vmatpush1.msra.mxu0 0.0
        %995 = vmatprep.subr.mxu0 0.0
        %996 = vmatpush1.msra.mxu0 0.0
        %997 = vmatprep.subr.mxu0 0.0
        %998 = vmatpush1.msra.mxu0 0.0
        %999 = vmatprep.subr.mxu0 0.0
        %1000 = vmatpush1.msra.mxu0 0.0
        %1001 = vmatprep.subr.mxu0 0.0
        %1002 = vmatpush1.msra.mxu0 0.0
        %1003 = vmatprep.subr.mxu0 0.0
        %1004 = vmatpush1.msra.mxu0 0.0
        %1005 = vmatprep.subr.mxu0 0.0
        %1006 = vmatpush1.msra.mxu0 0.0
        %1007 = vmatprep.subr.mxu0 0.0
        %1008 = vmatpush1.msra.mxu0 0.0
        %1009 = vmatprep.subr.mxu0 0.0
        %1010 = vmatpush1.msra.mxu0 0.0
        %1011 = vmatprep.subr.mxu0 0.0
        %1012 = vmatpush1.msra.mxu0 0.0
        %1013 = vmatprep.subr.mxu0 0.0
        %1014 = vmatpush1.msra.mxu0 0.0
        %1015 = vmatprep.subr.mxu0 0.0
        %1016 = vmatpush1.msra.mxu0 0.0
        %1017 = vmatprep.subr.mxu0 0.0
        %1018 = vmatpush1.msra.mxu0 0.0
        %1019 = vmatprep.subr.mxu0 0.0
        %1020 = vmatpush1.msra.mxu0 0.0
        %1021 = vmatprep.subr.mxu0 0.0
        %1022 = vmatpush1.msra.mxu0 0.0
        %1023 = vmatprep.subr.mxu0 0.0
        %1024 = vmatpush1.msra.mxu0 0.0
        %1025 = vmatprep.subr.mxu0 0.0
        %1026 = vmatpush1.msra.mxu0 0.0
        %1027 = vmatprep.subr.mxu0 0.0
        %1028 = vmatpush1.msra.mxu0 0.0
        %1029 = vmatprep.subr.mxu0 0.0
        %1030 = vmatpush1.msra.mxu0 0.0
        %1031 = vmatprep.subr.mxu0 0.0
        %1032 = vmatpush1.msra.mxu0 0.0
        %1033 = vmatprep.subr.mxu0 0.0
        %1034 = vmatpush1.msra.mxu0 0.0
        %1035 = vmatprep.subr.mxu0 0.0
        %1036 = vmatpush1.msra.mxu0 0.0
        %1037 = vmatprep.subr.mxu0 0.0
        %1038 = vmatpush1.msra.mxu0 0.0
        %1039 = vmatprep.subr.mxu0 0.0
        %1040 = vmatpush1.msra.mxu0 0.0
        %1041 = vmatprep.mubr.f32.mxu0 0.0
        %1042 = vmatmul.mubr.f32.gmra.mrb[0].mxu0 %v975
        %v1043 = vpop.f32.mrb[0].mxu0
        %v1044 = vadd.f32 0.0, %v1043
        %v1045 = vpop.f32.mrb[0].mxu0
        %1046 = vdwg.mxu0
        %v1047 = vrcp.pop %v969
        %v1048 = vmul.f32 %v1044, %v1047
        %1050 = vrot.lane.b32.xlu0 %v1048, 48
        %v1051 = vpop.permute.xlu0 %1050
        %vm1053 = vcmask 523648
        %1054 = vst.msk [vmem:[#allocation3] sm:$0xff] %vm1053, %v1051
        %v1055 = vld [vmem:[#allocation3] sm:$0xff]
        %v1056 = vld [vmem:[%s4] sm:$0xff]
        %v1057 = vld [vmem:[%s4 + $0x8] sm:$0xff]
        %v1058 = vld [vmem:[%s4 + $0x10] sm:$0xff]
        %v1059 = vld [vmem:[%s4 + $0x18] sm:$0xff]
        %v1060 = vld [vmem:[%s4 + $0x20] sm:$0xff]
        %v1061 = vld [vmem:[%s4 + $0x28] sm:$0xff]
        %v1062 = vld [vmem:[%s4 + $0x30] sm:$0xff]
        %v1063 = vld [vmem:[%s4 + $0x38] sm:$0xff]
        %v1064 = vld [vmem:[%s5] sm:$0x1]
        %v1066 = vlaneseq
        %v1067 = vshrl.u32 %v1066, 7
        %v1068 = vsub.s32 0, %v1067
        %v1069 = vrot.slane %v1064, %v1068
        %v1072 = vsel %vm362, %v1055, 0
        %1074 = vmatprep.subr.mxu0 0.0
        %1075 = vmatpush1.msra.mxu0 %v1056
        %1076 = vmatprep.subr.mxu0 0.0
        %1077 = vmatpush1.msra.mxu0 %v1057
        %1078 = vmatprep.subr.mxu0 0.0
        %1079 = vmatpush1.msra.mxu0 %v1058
        %1080 = vmatprep.subr.mxu0 0.0
        %1081 = vmatpush1.msra.mxu0 %v1059
        %1082 = vmatprep.subr.mxu0 0.0
        %1083 = vmatpush1.msra.mxu0 %v1060
        %1084 = vmatprep.subr.mxu0 0.0
        %1085 = vmatpush1.msra.mxu0 %v1061
        %1086 = vmatprep.subr.mxu0 0.0
        %1087 = vmatpush1.msra.mxu0 %v1062
        %1088 = vmatprep.subr.mxu0 0.0
        %1089 = vmatpush1.msra.mxu0 %v1063
        %1090 = vmatprep.subr.mxu0 0.0
        %1091 = vmatpush1.msra.mxu0 0.0
        %1092 = vmatprep.subr.mxu0 0.0
        %1093 = vmatpush1.msra.mxu0 0.0
        %1094 = vmatprep.subr.mxu0 0.0
        %1095 = vmatpush1.msra.mxu0 0.0
        %1096 = vmatprep.subr.mxu0 0.0
        %1097 = vmatpush1.msra.mxu0 0.0
        %1098 = vmatprep.subr.mxu0 0.0
        %1099 = vmatpush1.msra.mxu0 0.0
        %1100 = vmatprep.subr.mxu0 0.0
        %1101 = vmatpush1.msra.mxu0 0.0
        %1102 = vmatprep.subr.mxu0 0.0
        %1103 = vmatpush1.msra.mxu0 0.0
        %1104 = vmatprep.subr.mxu0 0.0
        %1105 = vmatpush1.msra.mxu0 0.0
        %1106 = vmatprep.subr.mxu0 0.0
        %1107 = vmatpush1.msra.mxu0 0.0
        %1108 = vmatprep.subr.mxu0 0.0
        %1109 = vmatpush1.msra.mxu0 0.0
        %1110 = vmatprep.subr.mxu0 0.0
        %1111 = vmatpush1.msra.mxu0 0.0
        %1112 = vmatprep.subr.mxu0 0.0
        %1113 = vmatpush1.msra.mxu0 0.0
        %1114 = vmatprep.subr.mxu0 0.0
        %1115 = vmatpush1.msra.mxu0 0.0
        %1116 = vmatprep.subr.mxu0 0.0
        %1117 = vmatpush1.msra.mxu0 0.0
        %1118 = vmatprep.subr.mxu0 0.0
        %1119 = vmatpush1.msra.mxu0 0.0
        %1120 = vmatprep.subr.mxu0 0.0
        %1121 = vmatpush1.msra.mxu0 0.0
        %1122 = vmatprep.subr.mxu0 0.0
        %1123 = vmatpush1.msra.mxu0 0.0
        %1124 = vmatprep.subr.mxu0 0.0
        %1125 = vmatpush1.msra.mxu0 0.0
        %1126 = vmatprep.subr.mxu0 0.0
        %1127 = vmatpush1.msra.mxu0 0.0
        %1128 = vmatprep.subr.mxu0 0.0
        %1129 = vmatpush1.msra.mxu0 0.0
        %1130 = vmatprep.subr.mxu0 0.0
        %1131 = vmatpush1.msra.mxu0 0.0
        %1132 = vmatprep.subr.mxu0 0.0
        %1133 = vmatpush1.msra.mxu0 0.0
        %1134 = vmatprep.subr.mxu0 0.0
        %1135 = vmatpush1.msra.mxu0 0.0
        %1136 = vmatprep.subr.mxu0 0.0
        %1137 = vmatpush1.msra.mxu0 0.0
        %1138 = vmatprep.mubr.f32.mxu0 0.0
        %1139 = vmatmul.mubr.f32.gmra.mrb[0].mxu0 %v1072
        %v1140 = vpop.f32.mrb[0].mxu0
        %v1141 = vadd.f32 %v1069, %v1140
        %v1142 = vpop.f32.mrb[0].mxu0
        %1143 = vdwg.mxu0
        %1144 = vst.msk [vmem:[%s242] sm:$0xff] %vm248, %v1141
        %s1145 = sand.u32 %s159, 1
        %s1146 = scalar_lea.sflag [#allocation5], %s1145
        %s1147 = sand.u32 %s159, 1
        %s1148 = smul.addr %s1147, 8
        %s1149 = scalar_lea.vmem [#allocation4], %s1148
        // Predicated region
        $region45: #{tpu_custom_call.1} parent=43 // pred_check
          %p1150 = pneg %p169
        $region46: #{tpu_custom_call.1} parent=43 // pred_check_branch
          %1152 = sbr.rel (%p1150) target = $region48
        $region47: #{tpu_custom_call.1} parent=43 // pred_region
          %s1154 = ssub.s32 128, 128
          %1155 = vsyncadd %s1146, %s1154
          %s1156 = smul.addr %s20, 128
          %s1157 = scalar_lea.hbm %s6, %s1156
          %s1159 = sshll.u32 %s1149, 4
          %s1160 = int_to_ptr.vmem [resolvable:$true] %s1159
          %1162 = dma.vmem_to_hbm [thread:$0]  %s1160, 128, %s1157, %s1146
        $region48: #{tpu_custom_call.1} parent=43 // pred_fallthru
          _
      $region44: #{tpu_custom_call.1} parent=5 // pred_fallthru
        _
      %p1163 = scmp.le.s32.totalorder 2, %s15
      // Predicated region
      $region49: #{tpu_custom_call.1} parent=5 // pred_check
        %p1164 = pneg %p1163
      $region50: #{tpu_custom_call.1} parent=5 // pred_check_branch
        %1166 = sbr.rel (%p1164) target = $region52
      $region51: #{tpu_custom_call.1} parent=5 // pred_region
        %s1167 = ssub.s32 %s15, 2
        // Predicated region
        $region53: #{tpu_custom_call.1} parent=51 // pred_check
          %p1168 = pneg %p175
        $region54: #{tpu_custom_call.1} parent=51 // pred_check_branch
          %1170 = sbr.rel (%p1168) target = $region56
        $region55: #{tpu_custom_call.1} parent=51 // pred_region
          %s1171 = sand.u32 %s160, 1
          %s1172 = scalar_lea.sflag [#allocation5], %s1171
          %s1173 = sand.u32 %s160, 1
          %s1174 = smul.addr %s1173, 8
          %s1175 = scalar_lea.vmem [#allocation4], %s1174
          %1176 = dma.done %s1172, 128
        $region56: #{tpu_custom_call.1} parent=51 // pred_fallthru
          _
      $region52: #{tpu_custom_call.1} parent=5 // pred_fallthru
        _
    $region6: #{tpu_custom_call.1} parent=1 // loop_footer
      %s19 = sadd.s32 1, %s15
    $region7: #{tpu_custom_call.1} parent=1 // loop_footer_branch
      %14 = sbr.rel target = $region3
    $region8: #{tpu_custom_call.1} parent=1 // loop_exit
      _
    %1177 = vsyncpa [#allocation5], 1
    %s1178 = scalar_lea.sflag [#allocation5], 1
    %1179 = vsyncpa %s1178, 1

</llo_original>
